<compile_context>
chip_gen: v5e
topology: v5e:2x2
jax: 0.10.0
libtpu: 0.0.40
codegen_flags: <defaults>
</compile_context>

<pallas_src>
import functools

import jax
import jax.numpy as jnp
from jax.experimental import pallas as pl
from jax.experimental.pallas import tpu as pltpu

_NEG_BIG = -1e30  # finite "-inf" for masked positions


# --------------------------------- kernel ---------------------------------
def _sdpa_kernel(*refs, inv_temperature, has_mask, return_attn):
    q_ref, k_ref, v_ref = refs[:3]
    pos = 3
    mask_ref = refs[pos] if has_mask else None
    pos += int(has_mask)
    out_ref = refs[pos]
    attn_ref = refs[pos + 1] if return_attn else None

    # Pre-scale q by 1/temperature (cheap: O(len_q*d_k)), then cast MXU
    # operands to bf16; accumulation stays f32.
    q = (q_ref[...].astype(jnp.float32) * inv_temperature).astype(jnp.bfloat16)
    k = k_ref[...].astype(jnp.bfloat16)

    # scores = q @ k^T (batched, contracting d_k) -> no XLU transpose needed.
    scores = jax.lax.dot_general(
        q, k,
        dimension_numbers=(((2,), (2,)), ((0,), (0,))),
        preferred_element_type=jnp.float32)            # (Bblk, len_q, len_k) f32

    if has_mask:
        keep = mask_ref[...].astype(jnp.int32) > 0     # widen i8 -> i32, then compare
        scores = jnp.where(keep, scores, _NEG_BIG)

    # numerically-stable softmax along keys, kept in f32 (v5e-safe).
    smax = jnp.max(scores, axis=-1, keepdims=True)
    p = jnp.exp(scores - smax)
    denom = jnp.sum(p, axis=-1, keepdims=True)
    attn = p * pl.reciprocal(denom, approx=True)       # EUP vrcp

    # output = attn @ v (batched), bf16 MXU operands, f32 accumulation.
    out = jax.lax.dot_general(
        attn.astype(jnp.bfloat16), v_ref[...].astype(jnp.bfloat16),
        dimension_numbers=(((2,), (1,)), ((0,), (0,))),
        preferred_element_type=jnp.float32)            # (Bblk, len_q, d_v)

    out_ref[...] = out.astype(out_ref.dtype)
    if return_attn:
        attn_ref[...] = attn.astype(attn_ref.dtype)


# --------------------------------- wrapper ---------------------------------
def scaled_dot_product_attention(q, k, v, mask=None, *, temperature,
                                 return_attn=True, block_b=None):
    """q: (B, len_q, d_k), k: (B, len_k, d_k), v: (B, len_k, d_v),
    mask: optional (B, len_q, len_k) int/bool (1 = keep).
    Returns (out, attn) when return_attn else out."""
    B, len_q, d_k = q.shape
    _, len_k, _ = k.shape
    _, _, d_v = v.shape
    inv_t = 1.0 / float(temperature)
    has_mask = mask is not None
    itemsize = jnp.dtype(q.dtype).itemsize

    if block_b is None:
        # keep >=2 grid steps when possible so v7x's two TensorCores both get
        # a share of the parallel batch axis; a single big step is fine on the
        # single-TC v5e/v6e too (megacore sharding is a no-op there).
        block_b = B // 2 if (B % 2 == 0 and B >= 2) else B
    assert B % block_b == 0, "block_b must divide the batch size"
    n_steps = B // block_b

    in_specs = [
        pl.BlockSpec((block_b, len_q, d_k), lambda b: (b, 0, 0)),   # q
        pl.BlockSpec((block_b, len_k, d_k), lambda b: (b, 0, 0)),   # k
        pl.BlockSpec((block_b, len_k, d_v), lambda b: (b, 0, 0)),   # v
    ]
    args = [q, k, v]
    if has_mask:
        in_specs.append(pl.BlockSpec((block_b, len_q, len_k), lambda b: (b, 0, 0)))
        args.append(mask.astype(jnp.int8))                          # narrow HBM/VMEM traffic

    if return_attn:
        out_shape = (jax.ShapeDtypeStruct((B, len_q, d_v), q.dtype),
                     jax.ShapeDtypeStruct((B, len_q, len_k), q.dtype))
        out_specs = [pl.BlockSpec((block_b, len_q, d_v), lambda b: (b, 0, 0)),
                     pl.BlockSpec((block_b, len_q, len_k), lambda b: (b, 0, 0))]
    else:
        out_shape = jax.ShapeDtypeStruct((B, len_q, d_v), q.dtype)
        out_specs = pl.BlockSpec((block_b, len_q, d_v), lambda b: (b, 0, 0))

    # Advisory cost hint for XLA's scheduler around the custom call.
    flops = 2 * B * len_q * len_k * (d_k + d_v)
    bytes_accessed = (B * len_q * d_k + B * len_k * d_k + B * len_k * d_v
                      + B * len_q * d_v) * itemsize
    if has_mask:
        bytes_accessed += B * len_q * len_k                          # int8 mask
    if return_attn:
        bytes_accessed += B * len_q * len_k * itemsize
    cost = pl.CostEstimate(flops=flops,
                           transcendentals=B * len_q * len_k,
                           bytes_accessed=bytes_accessed)

    # Explicit VMEM budget: double-buffered blocks + f32 in-kernel temporaries
    # with headroom, capped at v7x's 64 MiB physical VMEM (v5e/v6e could go
    # higher for very large tiles).
    blk_in = block_b * (len_q * d_k + len_k * d_k + len_k * d_v) * itemsize
    if has_mask:
        blk_in += block_b * len_q * len_k                            # int8
    blk_out = block_b * len_q * d_v * itemsize
    if return_attn:
        blk_out += block_b * len_q * len_k * itemsize
    tmp = 6 * block_b * len_q * len_k * 4                            # f32 scores/p/attn
    vmem_limit = int(min(max(2 * (blk_in + blk_out) + tmp + (4 << 20), 32 << 20),
                         64 << 20))

    result = pl.pallas_call(
        functools.partial(_sdpa_kernel, inv_temperature=inv_t,
                          has_mask=has_mask, return_attn=return_attn),
        out_shape=out_shape,
        grid_spec=pltpu.PrefetchScalarGridSpec(
            num_scalar_prefetch=0,
            grid=(n_steps,),
            in_specs=in_specs,
            out_specs=out_specs,
        ),
        compiler_params=pltpu.CompilerParams(
            dimension_semantics=("parallel",),
            vmem_limit_bytes=vmem_limit),
        cost_estimate=cost,
    )(*args)

    if return_attn:
        out, attn = result
        return out, attn
    return result


# -------------------------- pure-JAX reference (check) --------------------------
def _reference(q, k, v, mask, temperature):
    scores = jnp.einsum("bqd,bkd->bqk", q, k) / temperature
    if mask is not None:
        scores = jnp.where(mask > 0, scores, _NEG_BIG)
    attn = jax.nn.softmax(scores, axis=-1)
    out = jnp.einsum("bqk,bkd->bqd", attn, v)
    return out, attn


if __name__ == "__main__":
    # small shapes consistent with the module: batch = sz_b*n_head = 8, seq = 8, d_k = d_v = 16
    B, seq, d_k, d_v = 8, 8, 16, 16
    temperature = float(d_k) ** 0.5

    key = jax.random.PRNGKey(0)
    kq, kk, kv, km = jax.random.split(key, 4)
    q = jax.random.normal(kq, (B, seq, d_k), jnp.float32)
    k = jax.random.normal(kk, (B, seq, d_k), jnp.float32)
    v = jax.random.normal(kv, (B, seq, d_v), jnp.float32)
    # 0/1 mask of real positions; guarantee at least one real key per query row
    mask = jax.random.bernoulli(km, 0.7, (B, seq, seq)).astype(jnp.int32)
    mask = mask.at[:, :, 0].set(1)

    out, attn = scaled_dot_product_attention(q, k, v, mask, temperature=temperature)
    out = jax.block_until_ready(out)
    attn = jax.block_until_ready(attn)

    ref_out, ref_attn = _reference(q, k, v, mask, temperature)
    assert out.shape == (B, seq, d_v)
    assert attn.shape == (B, seq, seq)
    # bf16 MXU operands + approx reciprocal -> looser tolerance vs f32 reference
    assert jnp.allclose(attn, ref_attn, atol=2e-2, rtol=2e-2)
    assert jnp.allclose(out, ref_out, atol=2e-2, rtol=2e-2)

    # mask=None path
    out2, attn2 = scaled_dot_product_attention(q, k, v, None, temperature=temperature)
    out2 = jax.block_until_ready(out2)
    ref_out2, ref_attn2 = _reference(q, k, v, None, temperature)
    assert jnp.allclose(attn2, ref_attn2, atol=2e-2, rtol=2e-2)
    assert jnp.allclose(out2, ref_out2, atol=2e-2, rtol=2e-2)

    # output-only path (attn writeback skipped entirely)
    out3 = scaled_dot_product_attention(q, k, v, mask, temperature=temperature,
                                        return_attn=False)
    out3 = jax.block_until_ready(out3)
    assert out3.shape == (B, seq, d_v)
    assert jnp.allclose(out3, ref_out, atol=2e-2, rtol=2e-2)

    print("KERNEL_OK")
</pallas_src>

<mosaic_0001>
module attributes {stable_mosaic.version = 11 : i64} {
  func.func @_sdpa_kernel(%arg0: i32, %arg1: memref<4x8x16xf32, #tpu.memory_space<vmem>>, %arg2: memref<4x8x16xf32, #tpu.memory_space<vmem>>, %arg3: memref<4x8x16xf32, #tpu.memory_space<vmem>>, %arg4: memref<4x8x8xi8, #tpu.memory_space<vmem>>, %arg5: memref<4x8x16xf32, #tpu.memory_space<vmem>>, %arg6: memref<4x8x8xf32, #tpu.memory_space<vmem>>) attributes {dimension_semantics = [#tpu.dimension_semantics<parallel>], iteration_bounds = array<i64: 2>, scalar_prefetch = 0 : i64, scratch_operands = 0 : i64, tpu.core_type = #tpu.core_type<tc>, window_params = [{transform_indices = @transform_0, window_bounds = array<i64: 4, 8, 16>}, {transform_indices = @transform_1, window_bounds = array<i64: 4, 8, 16>}, {transform_indices = @transform_2, window_bounds = array<i64: 4, 8, 16>}, {transform_indices = @transform_3, window_bounds = array<i64: 4, 8, 8>}, {transform_indices = @transform_4, window_bounds = array<i64: 4, 8, 16>}, {transform_indices = @transform_5, window_bounds = array<i64: 4, 8, 8>}]} {
    %c0 = arith.constant 0 : index
    %c0_0 = arith.constant 0 : index
    %c0_1 = arith.constant 0 : index
    %0 = vector.load %arg1[%c0, %c0_0, %c0_1] : memref<4x8x16xf32, #tpu.memory_space<vmem>>, vector<4x8x16xf32>
    %cst = arith.constant 2.500000e-01 : f32
    %1 = vector.broadcast %cst : f32 to vector<4x8x16xf32>
    %2 = arith.mulf %0, %1 : vector<4x8x16xf32>
    %3 = arith.truncf %2 : vector<4x8x16xf32> to vector<4x8x16xbf16>
    %c0_2 = arith.constant 0 : index
    %c0_3 = arith.constant 0 : index
    %c0_4 = arith.constant 0 : index
    %4 = vector.load %arg2[%c0_2, %c0_3, %c0_4] : memref<4x8x16xf32, #tpu.memory_space<vmem>>, vector<4x8x16xf32>
    %5 = arith.truncf %4 : vector<4x8x16xf32> to vector<4x8x16xbf16>
    %cst_5 = arith.constant dense<0.000000e+00> : vector<4x8x8xf32>
    %6 = tpu.matmul %3, %5, %cst_5 {dimension_numbers = #tpu.dot_dimension_numbers<[2], [2], [1], [1], [0, 0, 0, 1, 1, 1], [0], [0]>} : vector<4x8x16xbf16>, vector<4x8x16xbf16>, vector<4x8x8xf32> -> vector<4x8x8xf32>
    %c0_6 = arith.constant 0 : index
    %c0_7 = arith.constant 0 : index
    %c0_8 = arith.constant 0 : index
    %7 = vector.load %arg4[%c0_6, %c0_7, %c0_8] : memref<4x8x8xi8, #tpu.memory_space<vmem>>, vector<4x8x8xi8>
    %8 = arith.extsi %7 : vector<4x8x8xi8> to vector<4x8x8xi32>
    %c0_i32 = arith.constant 0 : i32
    %9 = vector.broadcast %c0_i32 : i32 to vector<4x8x8xi32>
    %10 = arith.cmpi sgt, %8, %9 : vector<4x8x8xi32>
    %cst_9 = arith.constant -1.000000e+30 : f32
    %11 = vector.broadcast %cst_9 : f32 to vector<4x8x8xf32>
    %12 = arith.select %10, %6, %11 : vector<4x8x8xi1>, vector<4x8x8xf32>
    %cst_10 = arith.constant dense<0xFF800000> : vector<4x8xf32>
    %13 = vector.multi_reduction <maximumf>, %12, %cst_10 [2] : vector<4x8x8xf32> to vector<4x8xf32>
    %14 = vector.shape_cast %13 : vector<4x8xf32> to vector<4x8x1xf32>
    %15 = vector.broadcast %14 : vector<4x8x1xf32> to vector<4x8x8xf32>
    %16 = arith.subf %12, %15 : vector<4x8x8xf32>
    %17 = math.exp %16 : vector<4x8x8xf32>
    %cst_11 = arith.constant dense<0.000000e+00> : vector<4x8xf32>
    %18 = vector.multi_reduction <add>, %17, %cst_11 [2] : vector<4x8x8xf32> to vector<4x8xf32>
    %19 = vector.shape_cast %18 : vector<4x8xf32> to vector<4x8x1xf32>
    %20 = tpu.reciprocal %19 {approx = true} : vector<4x8x1xf32> -> vector<4x8x1xf32>
    %21 = vector.broadcast %20 : vector<4x8x1xf32> to vector<4x8x8xf32>
    %22 = arith.mulf %17, %21 : vector<4x8x8xf32>
    %23 = arith.truncf %22 : vector<4x8x8xf32> to vector<4x8x8xbf16>
    %c0_12 = arith.constant 0 : index
    %c0_13 = arith.constant 0 : index
    %c0_14 = arith.constant 0 : index
    %24 = vector.load %arg3[%c0_12, %c0_13, %c0_14] : memref<4x8x16xf32, #tpu.memory_space<vmem>>, vector<4x8x16xf32>
    %25 = arith.truncf %24 : vector<4x8x16xf32> to vector<4x8x16xbf16>
    %cst_15 = arith.constant dense<0.000000e+00> : vector<4x8x16xf32>
    %26 = tpu.matmul %23, %25, %cst_15 {dimension_numbers = #tpu.dot_dimension_numbers<[2], [1], [1], [2], [0, 0, 0, 1, 1, 2], [0], [0]>} : vector<4x8x8xbf16>, vector<4x8x16xbf16>, vector<4x8x16xf32> -> vector<4x8x16xf32>
    %c0_16 = arith.constant 0 : index
    %c0_17 = arith.constant 0 : index
    %c0_18 = arith.constant 0 : index
    %27 = vector.load %arg5[%c0_16, %c0_17, %c0_18] : memref<4x8x16xf32, #tpu.memory_space<vmem>>, vector<4x8x16xf32>
    tpu.vector_store %arg5[%c0_16, %c0_17, %c0_18], %26 {strides = array<i32>} : memref<4x8x16xf32, #tpu.memory_space<vmem>>, vector<4x8x16xf32>,
    %c0_19 = arith.constant 0 : index
    %c0_20 = arith.constant 0 : index
    %c0_21 = arith.constant 0 : index
    %28 = vector.load %arg6[%c0_19, %c0_20, %c0_21] : memref<4x8x8xf32, #tpu.memory_space<vmem>>, vector<4x8x8xf32>
    tpu.vector_store %arg6[%c0_19, %c0_20, %c0_21], %22 {strides = array<i32>} : memref<4x8x8xf32, #tpu.memory_space<vmem>>, vector<4x8x8xf32>,
    return
  }
  func.func @transform_0(%arg0: i32) -> (i32, i32, i32) {
    %c0_i32 = arith.constant 0 : i32
    %c0_i32_0 = arith.constant 0 : i32
    %c0_i32_1 = arith.constant 0 : i32
    return %arg0, %c0_i32, %c0_i32_0 : i32, i32, i32
  }
  func.func @transform_1(%arg0: i32) -> (i32, i32, i32) {
    %c0_i32 = arith.constant 0 : i32
    %c0_i32_0 = arith.constant 0 : i32
    %c0_i32_1 = arith.constant 0 : i32
    return %arg0, %c0_i32, %c0_i32_0 : i32, i32, i32
  }
  func.func @transform_2(%arg0: i32) -> (i32, i32, i32) {
    %c0_i32 = arith.constant 0 : i32
    %c0_i32_0 = arith.constant 0 : i32
    %c0_i32_1 = arith.constant 0 : i32
    return %arg0, %c0_i32, %c0_i32_0 : i32, i32, i32
  }
  func.func @transform_3(%arg0: i32) -> (i32, i32, i32) {
    %c0_i32 = arith.constant 0 : i32
    %c0_i32_0 = arith.constant 0 : i32
    %c0_i32_1 = arith.constant 0 : i32
    return %arg0, %c0_i32, %c0_i32_0 : i32, i32, i32
  }
  func.func @transform_4(%arg0: i32) -> (i32, i32, i32) {
    %c0_i32 = arith.constant 0 : i32
    %c0_i32_0 = arith.constant 0 : i32
    %c0_i32_1 = arith.constant 0 : i32
    return %arg0, %c0_i32, %c0_i32_0 : i32, i32, i32
  }
  func.func @transform_5(%arg0: i32) -> (i32, i32, i32) {
    %c0_i32 = arith.constant 0 : i32
    %c0_i32_0 = arith.constant 0 : i32
    %c0_i32_1 = arith.constant 0 : i32
    return %arg0, %c0_i32, %c0_i32_0 : i32, i32, i32
  }
}

</mosaic_0001>

<llo_original>
// kernel: tpu_custom_call.1
$region0: #{tpu_custom_call.1}
  #allocation0 [shape = 'u32[]', space=smem, size = 0x4, offset = 0x4, fixed_abs, tag = 'smem constant byte address 0x4 - core index']
  #allocation1 [shape = 'u32[72,128]{1,0:T(1,128)}', space=vmem, size = 0x9000, scoped, tag = 'internal scratch']
  %s0 = inlined_call_operand.hbm [shape: f32[8,8,16], index: 0, kind: input, shape index: {}]
  %s1 = inlined_call_operand.hbm [shape: f32[8,8,16], index: 1, kind: input, shape index: {}]
  %s2 = inlined_call_operand.hbm [shape: f32[8,8,16], index: 2, kind: input, shape index: {}]
  %s3 = inlined_call_operand.hbm [shape: s8[8,8,8], index: 3, kind: input, shape index: {}]
  %s4 = inlined_call_operand.hbm [shape: f32[8,8,16], index: 4, kind: output, shape index: {0}]
  %s5 = inlined_call_operand.hbm [shape: f32[8,8,8], index: 5, kind: output, shape index: {1}]
  %6 = xla_tuple %s4, %s5
  %s7 = sld [smem:[#allocation0]]
  $region73: #{tpu_custom_call.1} parent=0
    _
  %s9 = ssub.s32 1, %s7
  %s10 = scalar_select 0, %s9, %s7
  $region1: #{tpu_custom_call.1} parent=0
    #allocation2 [shape = 'u8[32768]{0}', space=vmem, size = 0x8000, scoped, tag = 'input window, operand 0']
    #allocation3 [shape = 's32[2]{0}', space=sflag, size = 0x8, scoped, tag = 'scoped memory for tpu_custom_call.1']
    #allocation4 [shape = 's32[2]{0}', space=sflag, size = 0x8, scoped, tag = 'scoped memory for tpu_custom_call.1']
    #allocation5 [shape = 'u8[32768]{0}', space=vmem, size = 0x8000, scoped, tag = 'input window, operand 1']
    #allocation6 [shape = 's32[2]{0}', space=sflag, size = 0x8, scoped, tag = 'scoped memory for tpu_custom_call.1']
    #allocation7 [shape = 'u8[32768]{0}', space=vmem, size = 0x8000, scoped, tag = 'input window, operand 2']
    #allocation8 [shape = 'u8[8192]{0}', space=vmem, size = 0x2000, scoped, tag = 'input window, operand 3']
    #allocation9 [shape = 's32[2]{0}', space=sflag, size = 0x8, scoped, tag = 'scoped memory for tpu_custom_call.1']
    #allocation10 [shape = 'u8[32768]{0}', space=vmem, size = 0x8000, scoped, tag = 'output window, operand 0']
    #allocation11 [shape = 'u8[32768]{0}', space=vmem, size = 0x8000, scoped, tag = 'output window, operand 1']
    #allocation12 [shape = 's32[2]{0}', space=sflag, size = 0x8, scoped, tag = 'scoped memory for tpu_custom_call.1']
    %11 = vsyncpa [#allocation3], 0
    %s12 = scalar_lea.sflag [#allocation3], 1
    %13 = vsyncpa %s12, 0
    %14 = vsyncpa [#allocation6], 0
    %s15 = scalar_lea.sflag [#allocation6], 1
    %16 = vsyncpa %s15, 0
    %17 = vsyncpa [#allocation9], 0
    %s18 = scalar_lea.sflag [#allocation9], 1
    %19 = vsyncpa %s18, 0
    %20 = vsyncpa [#allocation4], 0
    %s21 = scalar_lea.sflag [#allocation4], 1
    %22 = vsyncpa %s21, 0
    %23 = vsyncpa [#allocation12], 0
    %s24 = scalar_lea.sflag [#allocation12], 1
    %25 = vsyncpa %s24, 0
    loop: start=0, step=1, limit=4
    $region2: #{tpu_custom_call.1} parent=1 // loop_pre_header
      _
    $region3: #{tpu_custom_call.1} parent=1 // loop_header
      %s27 = sphi 0, %s31
      %p28 = scmp.ge.s32.totalorder %s27, 4
      %s37 = sphi 0, %s39
      %s40 = sphi 0, %s37
      %s41 = sphi 0, %s40
      %s57 = sphi 0, %s41
      %s63 = sphi 0, %s65
      %s66 = sphi 0, %s63
      %s67 = sphi 0, %s66
      %s83 = sphi 0, %s67
      %s89 = sphi 0, %s91
      %s92 = sphi 0, %s89
      %s93 = sphi 0, %s92
      %s109 = sphi 0, %s93
      %s115 = sphi 0, %s117
      %s118 = sphi 0, %s115
      %s119 = sphi 0, %s118
      %s135 = sphi 0, %s119
      %s141 = sphi 0, %s143
      %s144 = sphi 0, %s141
      %s145 = sphi 0, %s144
      %s161 = sphi 0, %s145
      %s167 = sphi 0, %s169
      %s170 = sphi 0, %s167
      %s171 = sphi 0, %s170
      %s187 = sphi 0, %s171
    $region4: #{tpu_custom_call.1} parent=1 // loop_header_branch
      %30 = sbr.rel (%p28) target = $region8
    $region5: #{tpu_custom_call.1} parent=1 // loop_body
      %s32 = ssub.s32 %s27, 1
      %s33 = ssub.s32 %s27, 2
      %s34 = sadd.s32 %s27, 1
      %s35 = ssub.s32 %s27, %s34
      %p36 = scmp.eq.s32.totalorder %s35, 0
      %s38 = sadd.s32 %s37, 1
      %s39 = scalar_select %p36, %s37, %s38
      %p42 = pneg %p36
      %p43 = scmp.eq.s32.totalorder %s27, 1
      %p44 = por %p42, %p43
      %p45 = scmp.ne.s32.totalorder %s37, %s40
      %p46 = scmp.eq.s32.totalorder %s27, 0
      %p47 = por %p45, %p46
      %p48 = scmp.ne.s32.totalorder %s37, %s40
      %p49 = scmp.eq.s32.totalorder %s32, 1
      %p50 = por %p48, %p49
      %p51 = scmp.ne.s32.totalorder %s40, %s41
      %p52 = scmp.eq.s32.totalorder %s32, 0
      %p53 = por %p51, %p52
      %p54 = scmp.ne.s32.totalorder %s40, %s41
      %p55 = scmp.eq.s32.totalorder %s33, 1
      %p56 = por %p54, %p55
      %p58 = scmp.ne.s32.totalorder %s41, %s57
      %p59 = scmp.eq.s32.totalorder %s33, 0
      %p60 = por %p58, %p59
      %s61 = ssub.s32 %s27, %s34
      %p62 = scmp.eq.s32.totalorder %s61, 0
      %s64 = sadd.s32 %s63, 1
      %s65 = scalar_select %p62, %s63, %s64
      %p68 = pneg %p62
      %p69 = scmp.eq.s32.totalorder %s27, 1
      %p70 = por %p68, %p69
      %p71 = scmp.ne.s32.totalorder %s63, %s66
      %p72 = scmp.eq.s32.totalorder %s27, 0
      %p73 = por %p71, %p72
      %p74 = scmp.ne.s32.totalorder %s63, %s66
      %p75 = scmp.eq.s32.totalorder %s32, 1
      %p76 = por %p74, %p75
      %p77 = scmp.ne.s32.totalorder %s66, %s67
      %p78 = scmp.eq.s32.totalorder %s32, 0
      %p79 = por %p77, %p78
      %p80 = scmp.ne.s32.totalorder %s66, %s67
      %p81 = scmp.eq.s32.totalorder %s33, 1
      %p82 = por %p80, %p81
      %p84 = scmp.ne.s32.totalorder %s67, %s83
      %p85 = scmp.eq.s32.totalorder %s33, 0
      %p86 = por %p84, %p85
      %s87 = ssub.s32 %s27, %s34
      %p88 = scmp.eq.s32.totalorder %s87, 0
      %s90 = sadd.s32 %s89, 1
      %s91 = scalar_select %p88, %s89, %s90
      %p94 = pneg %p88
      %p95 = scmp.eq.s32.totalorder %s27, 1
      %p96 = por %p94, %p95
      %p97 = scmp.ne.s32.totalorder %s89, %s92
      %p98 = scmp.eq.s32.totalorder %s27, 0
      %p99 = por %p97, %p98
      %p100 = scmp.ne.s32.totalorder %s89, %s92
      %p101 = scmp.eq.s32.totalorder %s32, 1
      %p102 = por %p100, %p101
      %p103 = scmp.ne.s32.totalorder %s92, %s93
      %p104 = scmp.eq.s32.totalorder %s32, 0
      %p105 = por %p103, %p104
      %p106 = scmp.ne.s32.totalorder %s92, %s93
      %p107 = scmp.eq.s32.totalorder %s33, 1
      %p108 = por %p106, %p107
      %p110 = scmp.ne.s32.totalorder %s93, %s109
      %p111 = scmp.eq.s32.totalorder %s33, 0
      %p112 = por %p110, %p111
      %s113 = ssub.s32 %s27, %s34
      %p114 = scmp.eq.s32.totalorder %s113, 0
      %s116 = sadd.s32 %s115, 1
      %s117 = scalar_select %p114, %s115, %s116
      %p120 = pneg %p114
      %p121 = scmp.eq.s32.totalorder %s27, 1
      %p122 = por %p120, %p121
      %p123 = scmp.ne.s32.totalorder %s115, %s118
      %p124 = scmp.eq.s32.totalorder %s27, 0
      %p125 = por %p123, %p124
      %p126 = scmp.ne.s32.totalorder %s115, %s118
      %p127 = scmp.eq.s32.totalorder %s32, 1
      %p128 = por %p126, %p127
      %p129 = scmp.ne.s32.totalorder %s118, %s119
      %p130 = scmp.eq.s32.totalorder %s32, 0
      %p131 = por %p129, %p130
      %p132 = scmp.ne.s32.totalorder %s118, %s119
      %p133 = scmp.eq.s32.totalorder %s33, 1
      %p134 = por %p132, %p133
      %p136 = scmp.ne.s32.totalorder %s119, %s135
      %p137 = scmp.eq.s32.totalorder %s33, 0
      %p138 = por %p136, %p137
      %s139 = ssub.s32 %s27, %s34
      %p140 = scmp.eq.s32.totalorder %s139, 0
      %s142 = sadd.s32 %s141, 1
      %s143 = scalar_select %p140, %s141, %s142
      %p146 = pneg %p140
      %p147 = scmp.eq.s32.totalorder %s27, 1
      %p148 = por %p146, %p147
      %p149 = scmp.ne.s32.totalorder %s141, %s144
      %p150 = scmp.eq.s32.totalorder %s27, 0
      %p151 = por %p149, %p150
      %p152 = scmp.ne.s32.totalorder %s141, %s144
      %p153 = scmp.eq.s32.totalorder %s32, 1
      %p154 = por %p152, %p153
      %p155 = scmp.ne.s32.totalorder %s144, %s145
      %p156 = scmp.eq.s32.totalorder %s32, 0
      %p157 = por %p155, %p156
      %p158 = scmp.ne.s32.totalorder %s144, %s145
      %p159 = scmp.eq.s32.totalorder %s33, 1
      %p160 = por %p158, %p159
      %p162 = scmp.ne.s32.totalorder %s145, %s161
      %p163 = scmp.eq.s32.totalorder %s33, 0
      %p164 = por %p162, %p163
      %s165 = ssub.s32 %s27, %s34
      %p166 = scmp.eq.s32.totalorder %s165, 0
      %s168 = sadd.s32 %s167, 1
      %s169 = scalar_select %p166, %s167, %s168
      %p172 = pneg %p166
      %p173 = scmp.eq.s32.totalorder %s27, 1
      %p174 = por %p172, %p173
      %p175 = scmp.ne.s32.totalorder %s167, %s170
      %p176 = scmp.eq.s32.totalorder %s27, 0
      %p177 = por %p175, %p176
      %p178 = scmp.ne.s32.totalorder %s167, %s170
      %p179 = scmp.eq.s32.totalorder %s32, 1
      %p180 = por %p178, %p179
      %p181 = scmp.ne.s32.totalorder %s170, %s171
      %p182 = scmp.eq.s32.totalorder %s32, 0
      %p183 = por %p181, %p182
      %p184 = scmp.ne.s32.totalorder %s170, %s171
      %p185 = scmp.eq.s32.totalorder %s33, 1
      %p186 = por %p184, %p185
      %p188 = scmp.ne.s32.totalorder %s171, %s187
      %p189 = scmp.eq.s32.totalorder %s33, 0
      %p190 = por %p188, %p189
      %p191 = scmp.le.s32.totalorder 1, %s27
      %p192 = scmp.lt.s32.totalorder %s27, 3
      %p193 = pnand %p191, %p192
      %p194 = pneg %p193
      // Predicated region
      $region9: #{tpu_custom_call.1} parent=5 // pred_check
        _
      $region10: #{tpu_custom_call.1} parent=5 // pred_check_branch
        %196 = sbr.rel (%p193) target = $region12
      $region11: #{tpu_custom_call.1} parent=5 // pred_region
        %s197 = ssub.s32 %s27, 1
      $region12: #{tpu_custom_call.1} parent=5 // pred_fallthru
        _
      %p198 = scmp.lt.s32.totalorder %s27, 2
      // Predicated region
      $region13: #{tpu_custom_call.1} parent=5 // pred_check
        %p199 = pneg %p198
      $region14: #{tpu_custom_call.1} parent=5 // pred_check_branch
        %201 = sbr.rel (%p199) target = $region16
      $region15: #{tpu_custom_call.1} parent=5 // pred_region
        // Predicated region
        $region17: #{tpu_custom_call.1} parent=15 // pred_check
          %p202 = pneg %p47
        $region18: #{tpu_custom_call.1} parent=15 // pred_check_branch
          %204 = sbr.rel (%p202) target = $region20
        $region19: #{tpu_custom_call.1} parent=15 // pred_region
          %s205 = sand.u32 %s37, 1
          %s206 = scalar_lea.sflag [#allocation3], %s205
          %s207 = sand.u32 %s37, 1
          %s208 = smul.addr %s207, 32
          %s209 = scalar_lea.vmem [#allocation2], %s208
          %s210 = smul.u32 4, %s27
          %212 = vsyncadd %s206, 0
          %s213 = smul.addr %s210, 8
          %s214 = scalar_lea.hbm %s0, %s213
          %s215 = sshll.u32 %s214, 4
          %s216 = int_to_ptr.hbm [resolvable:$true] %s215
          %s217 = sshll.u32 %s209, 4
          %s218 = int_to_ptr.vmem [resolvable:$true] %s217
          %223 = dma.hbm_to_vmem [thread:$0]  %s216, 512, %s218, %s206, 128, 128, 8
        $region20: #{tpu_custom_call.1} parent=15 // pred_fallthru
          _
        // Predicated region
        $region21: #{tpu_custom_call.1} parent=15 // pred_check
          %p224 = pneg %p73
        $region22: #{tpu_custom_call.1} parent=15 // pred_check_branch
          %226 = sbr.rel (%p224) target = $region24
        $region23: #{tpu_custom_call.1} parent=15 // pred_region
          %s227 = sand.u32 %s27, 1
          %s228 = scalar_lea.sflag [#allocation6], %s227
          %s229 = sand.u32 %s63, 1
          %s230 = smul.addr %s229, 32
          %s231 = scalar_lea.vmem [#allocation5], %s230
          %s232 = smul.u32 4, %s27
          %234 = vsyncadd %s228, 0
          %s235 = smul.addr %s232, 8
          %s236 = scalar_lea.hbm %s1, %s235
          %s237 = sshll.u32 %s236, 4
          %s238 = int_to_ptr.hbm [resolvable:$true] %s237
          %s239 = sshll.u32 %s231, 4
          %s240 = int_to_ptr.vmem [resolvable:$true] %s239
          %245 = dma.hbm_to_vmem [thread:$0]  %s238, 512, %s240, %s228, 128, 128, 8
        $region24: #{tpu_custom_call.1} parent=15 // pred_fallthru
          _
        // Predicated region
        $region25: #{tpu_custom_call.1} parent=15 // pred_check
          %p246 = pneg %p99
        $region26: #{tpu_custom_call.1} parent=15 // pred_check_branch
          %248 = sbr.rel (%p246) target = $region28
        $region27: #{tpu_custom_call.1} parent=15 // pred_region
          %s249 = sand.u32 %s27, 1
          %s250 = scalar_lea.sflag [#allocation6], %s249
          %s251 = sand.u32 %s89, 1
          %s252 = smul.addr %s251, 32
          %s253 = scalar_lea.vmem [#allocation7], %s252
          %s254 = smul.u32 4, %s27
          %256 = vsyncadd %s250, 0
          %s257 = smul.addr %s254, 8
          %s258 = scalar_lea.hbm %s2, %s257
          %s259 = sshll.u32 %s258, 4
          %s260 = int_to_ptr.hbm [resolvable:$true] %s259
          %s261 = sshll.u32 %s253, 4
          %s262 = int_to_ptr.vmem [resolvable:$true] %s261
          %267 = dma.hbm_to_vmem [thread:$0]  %s260, 512, %s262, %s250, 128, 128, 8
        $region28: #{tpu_custom_call.1} parent=15 // pred_fallthru
          _
        // Predicated region
        $region29: #{tpu_custom_call.1} parent=15 // pred_check
          %p268 = pneg %p125
        $region30: #{tpu_custom_call.1} parent=15 // pred_check_branch
          %270 = sbr.rel (%p268) target = $region32
        $region31: #{tpu_custom_call.1} parent=15 // pred_region
          %s271 = sand.u32 %s115, 1
          %s272 = scalar_lea.sflag [#allocation9], %s271
          %s273 = sand.u32 %s115, 1
          %s274 = smul.addr %s273, 8
          %s275 = scalar_lea.vmem [#allocation8], %s274
          %s276 = smul.u32 4, %s27
          %278 = vsyncadd %s272, 0
          %s279 = smul.addr %s276, 2
          %s280 = scalar_lea.hbm %s3, %s279
          %s281 = sshll.u32 %s280, 4
          %s282 = int_to_ptr.hbm [resolvable:$true] %s281
          %s283 = sshll.u32 %s275, 4
          %s284 = int_to_ptr.vmem [resolvable:$true] %s283
          %289 = dma.hbm_to_vmem [thread:$0]  %s282, 128, %s284, %s272, 32, 32, 2
        $region32: #{tpu_custom_call.1} parent=15 // pred_fallthru
          _
      $region16: #{tpu_custom_call.1} parent=5 // pred_fallthru
        _
      %p290 = scmp.le.s32.totalorder 1, %s27
      %p291 = scmp.lt.s32.totalorder %s27, 3
      %p292 = pnand %p290, %p291
      %p293 = pneg %p292
      // Predicated region
      $region33: #{tpu_custom_call.1} parent=5 // pred_check
        _
      $region34: #{tpu_custom_call.1} parent=5 // pred_check_branch
        %295 = sbr.rel (%p292) target = $region36
      $region35: #{tpu_custom_call.1} parent=5 // pred_region
        %s296 = ssub.s32 %s27, 1
        %s297 = sand.u32 %s40, 1
        %s298 = scalar_lea.sflag [#allocation3], %s297
        %s299 = sand.u32 %s40, 1
        %s300 = smul.addr %s299, 32
        %s301 = scalar_lea.vmem [#allocation2], %s300
        // Predicated region
        $region37: #{tpu_custom_call.1} parent=35 // pred_check
          %p302 = pneg %p53
        $region38: #{tpu_custom_call.1} parent=35 // pred_check_branch
          %304 = sbr.rel (%p302) target = $region40
        $region39: #{tpu_custom_call.1} parent=35 // pred_region
          %306 = dma.done %s298, 512
        $region40: #{tpu_custom_call.1} parent=35 // pred_fallthru
          _
        %s307 = sand.u32 %s32, 1
        %s308 = scalar_lea.sflag [#allocation6], %s307
        %s309 = sand.u32 %s66, 1
        %s310 = smul.addr %s309, 32
        %s311 = scalar_lea.vmem [#allocation5], %s310
        // Predicated region
        $region41: #{tpu_custom_call.1} parent=35 // pred_check
          %p312 = pneg %p79
        $region42: #{tpu_custom_call.1} parent=35 // pred_check_branch
          %314 = sbr.rel (%p312) target = $region44
        $region43: #{tpu_custom_call.1} parent=35 // pred_region
          %316 = dma.done %s308, 512
        $region44: #{tpu_custom_call.1} parent=35 // pred_fallthru
          _
        %s317 = sand.u32 %s32, 1
        %s318 = scalar_lea.sflag [#allocation6], %s317
        %s319 = sand.u32 %s92, 1
        %s320 = smul.addr %s319, 32
        %s321 = scalar_lea.vmem [#allocation7], %s320
        // Predicated region
        $region45: #{tpu_custom_call.1} parent=35 // pred_check
          %p322 = pneg %p105
        $region46: #{tpu_custom_call.1} parent=35 // pred_check_branch
          %324 = sbr.rel (%p322) target = $region48
        $region47: #{tpu_custom_call.1} parent=35 // pred_region
          %326 = dma.done %s318, 512
        $region48: #{tpu_custom_call.1} parent=35 // pred_fallthru
          _
        %s327 = sand.u32 %s118, 1
        %s328 = scalar_lea.sflag [#allocation9], %s327
        %s329 = sand.u32 %s118, 1
        %s330 = smul.addr %s329, 8
        %s331 = scalar_lea.vmem [#allocation8], %s330
        // Predicated region
        $region49: #{tpu_custom_call.1} parent=35 // pred_check
          %p332 = pneg %p131
        $region50: #{tpu_custom_call.1} parent=35 // pred_check_branch
          %334 = sbr.rel (%p332) target = $region52
        $region51: #{tpu_custom_call.1} parent=35 // pred_region
          %336 = dma.done %s328, 128
        $region52: #{tpu_custom_call.1} parent=35 // pred_fallthru
          _
        %s337 = sand.u32 %s40, 1
        %s338 = scalar_lea.sflag [#allocation3], %s337
        %s339 = sand.u32 %s40, 1
        %s340 = smul.addr %s339, 32
        %s341 = scalar_lea.vmem [#allocation2], %s340
        %p342 = pneg %p53
        %p343 = pneg %p50
        %s344 = sand.u32 %s32, 1
        %s345 = scalar_lea.sflag [#allocation6], %s344
        %s346 = sand.u32 %s66, 1
        %s347 = smul.addr %s346, 32
        %s348 = scalar_lea.vmem [#allocation5], %s347
        %p349 = pneg %p79
        %p350 = pneg %p76
        %s351 = sand.u32 %s32, 1
        %s352 = scalar_lea.sflag [#allocation6], %s351
        %s353 = sand.u32 %s92, 1
        %s354 = smul.addr %s353, 32
        %s355 = scalar_lea.vmem [#allocation7], %s354
        %p356 = pneg %p105
        %p357 = pneg %p102
        %s358 = sand.u32 %s118, 1
        %s359 = scalar_lea.sflag [#allocation9], %s358
        %s360 = sand.u32 %s118, 1
        %s361 = smul.addr %s360, 8
        %s362 = scalar_lea.vmem [#allocation8], %s361
        %p363 = pneg %p131
        %p364 = pneg %p128
        %p365 = pneg %p157
        %p366 = pneg %p154
        %s367 = sand.u32 %s144, 1
        %s368 = scalar_lea.sflag [#allocation4], %s367
        %s369 = sand.u32 %s144, 1
        %s370 = smul.addr %s369, 32
        %s371 = scalar_lea.vmem [#allocation10], %s370
        %p372 = pneg %p183
        %p373 = pneg %p180
        %s374 = sand.u32 %s170, 1
        %s375 = scalar_lea.sflag [#allocation12], %s374
        %s376 = sand.u32 %s170, 1
        %s377 = smul.addr %s376, 32
        %s378 = scalar_lea.vmem [#allocation11], %s377
        %s379 = smul.u32 4, %s32
        %s380 = smul.u32 4, %s32
        %s381 = smul.u32 4, %s32
        %s382 = smul.u32 4, %s32
        %s383 = smul.u32 4, %s32
        %s384 = smul.u32 4, %s32
        %v386 = vld [vmem:[%s301] sm:$0xff]
        %v387 = vld [vmem:[%s301 + $0x8] sm:$0xff]
        %v388 = vld [vmem:[%s301 + $0x10] sm:$0xff]
        %v389 = vld [vmem:[%s301 + $0x18] sm:$0xff]
        %v390 = vmul.f32 %v386, 0.25
        %v391 = vmul.f32 %v387, 0.25
        %v392 = vmul.f32 %v388, 0.25
        %v393 = vmul.f32 %v389, 0.25
        %v394 = vpack.c.bf16 %v390, %v390
        %v395 = vpack.c.bf16 %v391, %v391
        %v396 = vpack.c.bf16 %v392, %v392
        %v397 = vpack.c.bf16 %v393, %v393
        %v398 = vld [vmem:[%s311] sm:$0xff]
        %v399 = vld [vmem:[%s311 + $0x8] sm:$0xff]
        %v400 = vld [vmem:[%s311 + $0x10] sm:$0xff]
        %v401 = vld [vmem:[%s311 + $0x18] sm:$0xff]
        %v402 = vpack.c.bf16 %v398, %v398
        %v403 = vpack.c.bf16 %v399, %v399
        %v404 = vpack.c.bf16 %v400, %v400
        %v405 = vpack.c.bf16 %v401, %v401
        %vm406 = vcmask 130048
        %v408 = vsel %vm406, %v394, 0
        %v411 = vsel %vm406, %v402, 0
        %413 = vmatpush.bf16.xpose.msra.mxu0 0
        %414 = vmatpush.bf16.xpose.msra.mxu0 0
        %415 = vmatpush.bf16.xpose.msra.mxu0 0
        %416 = vmatpush.bf16.xpose.msra.mxu0 0
        %417 = vmatpush.bf16.xpose.msra.mxu0 0
        %418 = vmatpush.bf16.xpose.msra.mxu0 0
        %419 = vmatpush.bf16.xpose.msra.mxu0 0
        %420 = vmatpush.bf16.xpose.msra.mxu0 %v411
        %421 = vmatmul.bf16.gmra.mxu0 %v408
        %v422 = vpop.f32.mrf.mxu0
        %v423 = vadd.f32 0.0, %v422
        %v424 = vpop.f32.mrf.mxu0
        %425 = vdwg.mxu0
        %v427 = vsel %vm406, %v395, 0
        %v430 = vsel %vm406, %v403, 0
        %432 = vmatpush.bf16.xpose.msra.mxu0 0
        %433 = vmatpush.bf16.xpose.msra.mxu0 0
        %434 = vmatpush.bf16.xpose.msra.mxu0 0
        %435 = vmatpush.bf16.xpose.msra.mxu0 0
        %436 = vmatpush.bf16.xpose.msra.mxu0 0
        %437 = vmatpush.bf16.xpose.msra.mxu0 0
        %438 = vmatpush.bf16.xpose.msra.mxu0 0
        %439 = vmatpush.bf16.xpose.msra.mxu0 %v430
        %440 = vmatmul.bf16.gmra.mxu0 %v427
        %v441 = vpop.f32.mrf.mxu0
        %v442 = vadd.f32 0.0, %v441
        %v443 = vpop.f32.mrf.mxu0
        %444 = vdwg.mxu0
        %v446 = vsel %vm406, %v396, 0
        %v449 = vsel %vm406, %v404, 0
        %451 = vmatpush.bf16.xpose.msra.mxu0 0
        %452 = vmatpush.bf16.xpose.msra.mxu0 0
        %453 = vmatpush.bf16.xpose.msra.mxu0 0
        %454 = vmatpush.bf16.xpose.msra.mxu0 0
        %455 = vmatpush.bf16.xpose.msra.mxu0 0
        %456 = vmatpush.bf16.xpose.msra.mxu0 0
        %457 = vmatpush.bf16.xpose.msra.mxu0 0
        %458 = vmatpush.bf16.xpose.msra.mxu0 %v449
        %459 = vmatmul.bf16.gmra.mxu0 %v446
        %v460 = vpop.f32.mrf.mxu0
        %v461 = vadd.f32 0.0, %v460
        %v462 = vpop.f32.mrf.mxu0
        %463 = vdwg.mxu0
        %v465 = vsel %vm406, %v397, 0
        %v468 = vsel %vm406, %v405, 0
        %470 = vmatpush.bf16.xpose.msra.mxu0 0
        %471 = vmatpush.bf16.xpose.msra.mxu0 0
        %472 = vmatpush.bf16.xpose.msra.mxu0 0
        %473 = vmatpush.bf16.xpose.msra.mxu0 0
        %474 = vmatpush.bf16.xpose.msra.mxu0 0
        %475 = vmatpush.bf16.xpose.msra.mxu0 0
        %476 = vmatpush.bf16.xpose.msra.mxu0 0
        %477 = vmatpush.bf16.xpose.msra.mxu0 %v468
        %478 = vmatmul.bf16.gmra.mxu0 %v465
        %v479 = vpop.f32.mrf.mxu0
        %v480 = vadd.f32 0.0, %v479
        %v481 = vpop.f32.mrf.mxu0
        %482 = vdwg.mxu0
        %v483 = vld [vmem:[%s331] sm:$0x3]
        %v484 = vld [vmem:[%s331 + $0x2] sm:$0x3]
        %v485 = vld [vmem:[%s331 + $0x4] sm:$0x3]
        %v486 = vld [vmem:[%s331 + $0x6] sm:$0x3]
        %v487 = vunpack.c.0.s8 %v483
        %v488 = vunpack.c.0.s8 %v484
        %v489 = vunpack.c.0.s8 %v485
        %v490 = vunpack.c.0.s8 %v486
        %vm491 = vcmp.gt.s32.totalorder %v487, 0
        %vm492 = vcmp.gt.s32.totalorder %v488, 0
        %vm493 = vcmp.gt.s32.totalorder %v489, 0
        %vm494 = vcmp.gt.s32.totalorder %v490, 0
        %v495 = vsel %vm491, %v423, -1e+30
        %v496 = vsel %vm492, %v442, -1e+30
        %v497 = vsel %vm493, %v461, -1e+30
        %v498 = vsel %vm494, %v480, -1e+30
        %vm499 = vcmask 64512
        %v500 = vsel %vm499, %v495, -inf
        %501 = vmax.xlane.f32.xlu0 %v500
        %v502 = vpop.xlane.xlu0 %501
        %v503 = vsel %vm499, %v496, -inf
        %504 = vmax.xlane.f32.xlu0 %v503
        %v505 = vpop.xlane.xlu0 %504
        %v506 = vsel %vm499, %v497, -inf
        %507 = vmax.xlane.f32.xlu0 %v506
        %v508 = vpop.xlane.xlu0 %507
        %v509 = vsel %vm499, %v498, -inf
        %510 = vmax.xlane.f32.xlu0 %v509
        %v511 = vpop.xlane.xlu0 %510
        %v512 = vsub.f32 %v495, %v502
        %v513 = vsub.f32 %v496, %v505
        %v514 = vsub.f32 %v497, %v508
        %v515 = vsub.f32 %v498, %v511
        %v516 = vmul.f32 %v512, 1.442695
        %v517 = vpow.pop %v516
        %v518 = vmul.f32 %v513, 1.442695
        %v519 = vpow.pop %v518
        %v520 = vmul.f32 %v514, 1.442695
        %v521 = vpow.pop %v520
        %v522 = vmul.f32 %v515, 1.442695
        %v523 = vpow.pop %v522
        %v524 = vsel %vm499, %v517, 0.0
        %525 = vadd.xlane.f32.xlu0 %v524
        %v526 = vpop.xlane.xlu0 %525
        %v527 = vsel %vm499, %v519, 0.0
        %528 = vadd.xlane.f32.xlu0 %v527
        %v529 = vpop.xlane.xlu0 %528
        %v530 = vsel %vm499, %v521, 0.0
        %531 = vadd.xlane.f32.xlu0 %v530
        %v532 = vpop.xlane.xlu0 %531
        %v533 = vsel %vm499, %v523, 0.0
        %534 = vadd.xlane.f32.xlu0 %v533
        %v535 = vpop.xlane.xlu0 %534
        %v536 = vrcp.pop %v526
        %v537 = vrcp.pop %v529
        %v538 = vrcp.pop %v532
        %v539 = vrcp.pop %v535
        %v540 = vmul.f32 %v517, %v536
        %v541 = vmul.f32 %v519, %v537
        %v542 = vmul.f32 %v521, %v538
        %v543 = vmul.f32 %v523, %v539
        %v544 = vpack.c.bf16 %v540, %v540
        %v545 = vpack.c.bf16 %v541, %v541
        %v546 = vpack.c.bf16 %v542, %v542
        %v547 = vpack.c.bf16 %v543, %v543
        %v548 = vld [vmem:[%s321] sm:$0xff]
        %v549 = vld [vmem:[%s321 + $0x8] sm:$0xff]
        %v550 = vld [vmem:[%s321 + $0x10] sm:$0xff]
        %v551 = vld [vmem:[%s321 + $0x18] sm:$0xff]
        %v552 = vpack.c.bf16 %v548, %v548
        %v553 = vpack.c.bf16 %v549, %v549
        %v554 = vpack.c.bf16 %v550, %v550
        %v555 = vpack.c.bf16 %v551, %v551
        %v557 = vsel %vm499, %v544, 0
        %vm559 = vcmask 1043456
        %v561 = vsel %vm559, %v552, 0
        %563 = vmatpush.bf16.msra.mxu0 0
        %564 = vmatpush.bf16.msra.mxu0 0
        %565 = vmatpush.bf16.msra.mxu0 0
        %566 = vmatpush.bf16.msra.mxu0 0
        %567 = vmatpush.bf16.msra.mxu0 0
        %568 = vmatpush.bf16.msra.mxu0 0
        %569 = vmatpush.bf16.msra.mxu0 0
        %570 = vmatpush.bf16.msra.mxu0 %v561
        %571 = vmatmul.bf16.gmra.mxu0 %v557
        %v572 = vpop.f32.mrf.mxu0
        %v573 = vadd.f32 0.0, %v572
        %v574 = vpop.f32.mrf.mxu0
        %575 = vdwg.mxu0
        %v577 = vsel %vm499, %v545, 0
        %v580 = vsel %vm559, %v553, 0
        %582 = vmatpush.bf16.msra.mxu0 0
        %583 = vmatpush.bf16.msra.mxu0 0
        %584 = vmatpush.bf16.msra.mxu0 0
        %585 = vmatpush.bf16.msra.mxu0 0
        %586 = vmatpush.bf16.msra.mxu0 0
        %587 = vmatpush.bf16.msra.mxu0 0
        %588 = vmatpush.bf16.msra.mxu0 0
        %589 = vmatpush.bf16.msra.mxu0 %v580
        %590 = vmatmul.bf16.gmra.mxu0 %v577
        %v591 = vpop.f32.mrf.mxu0
        %v592 = vadd.f32 0.0, %v591
        %v593 = vpop.f32.mrf.mxu0
        %594 = vdwg.mxu0
        %v596 = vsel %vm499, %v546, 0
        %v599 = vsel %vm559, %v554, 0
        %601 = vmatpush.bf16.msra.mxu0 0
        %602 = vmatpush.bf16.msra.mxu0 0
        %603 = vmatpush.bf16.msra.mxu0 0
        %604 = vmatpush.bf16.msra.mxu0 0
        %605 = vmatpush.bf16.msra.mxu0 0
        %606 = vmatpush.bf16.msra.mxu0 0
        %607 = vmatpush.bf16.msra.mxu0 0
        %608 = vmatpush.bf16.msra.mxu0 %v599
        %609 = vmatmul.bf16.gmra.mxu0 %v596
        %v610 = vpop.f32.mrf.mxu0
        %v611 = vadd.f32 0.0, %v610
        %v612 = vpop.f32.mrf.mxu0
        %613 = vdwg.mxu0
        %v615 = vsel %vm499, %v547, 0
        %v618 = vsel %vm559, %v555, 0
        %620 = vmatpush.bf16.msra.mxu0 0
        %621 = vmatpush.bf16.msra.mxu0 0
        %622 = vmatpush.bf16.msra.mxu0 0
        %623 = vmatpush.bf16.msra.mxu0 0
        %624 = vmatpush.bf16.msra.mxu0 0
        %625 = vmatpush.bf16.msra.mxu0 0
        %626 = vmatpush.bf16.msra.mxu0 0
        %627 = vmatpush.bf16.msra.mxu0 %v618
        %628 = vmatmul.bf16.gmra.mxu0 %v615
        %v629 = vpop.f32.mrf.mxu0
        %v630 = vadd.f32 0.0, %v629
        %v631 = vpop.f32.mrf.mxu0
        %632 = vdwg.mxu0
        %633 = vst.msk [vmem:[%s371] sm:$0xff] %vm406, %v573
        %634 = vst.msk [vmem:[%s371 + $0x8] sm:$0xff] %vm406, %v592
        %635 = vst.msk [vmem:[%s371 + $0x10] sm:$0xff] %vm406, %v611
        %636 = vst.msk [vmem:[%s371 + $0x18] sm:$0xff] %vm406, %v630
        %637 = vst.msk [vmem:[%s378] sm:$0xff] %vm499, %v540
        %638 = vst.msk [vmem:[%s378 + $0x8] sm:$0xff] %vm499, %v541
        %639 = vst.msk [vmem:[%s378 + $0x10] sm:$0xff] %vm499, %v542
        %640 = vst.msk [vmem:[%s378 + $0x18] sm:$0xff] %vm499, %v543
        %s641 = sand.u32 %s144, 1
        %s642 = scalar_lea.sflag [#allocation4], %s641
        %s643 = sand.u32 %s144, 1
        %s644 = smul.addr %s643, 32
        %s645 = scalar_lea.vmem [#allocation10], %s644
        %s646 = sand.u32 %s170, 1
        %s647 = scalar_lea.sflag [#allocation12], %s646
        %s648 = sand.u32 %s170, 1
        %s649 = smul.addr %s648, 32
        %s650 = scalar_lea.vmem [#allocation11], %s649
        // Predicated region
        $region53: #{tpu_custom_call.1} parent=35 // pred_check
          %p651 = pneg %p154
        $region54: #{tpu_custom_call.1} parent=35 // pred_check_branch
          %653 = sbr.rel (%p651) target = $region56
        $region55: #{tpu_custom_call.1} parent=35 // pred_region
          %s654 = smul.u32 4, %s32
          %656 = vsyncadd %s642, 0
          %s657 = smul.addr %s654, 8
          %s658 = scalar_lea.hbm %s4, %s657
          %s659 = sshll.u32 %s645, 4
          %s660 = int_to_ptr.vmem [resolvable:$true] %s659
          %s661 = sshll.u32 %s658, 4
          %s662 = int_to_ptr.hbm [resolvable:$true] %s661
          %667 = dma.vmem_to_hbm [thread:$0]  %s660, 512, %s662, %s642, 128, 128, 8
        $region56: #{tpu_custom_call.1} parent=35 // pred_fallthru
          _
        // Predicated region
        $region57: #{tpu_custom_call.1} parent=35 // pred_check
          %p668 = pneg %p180
        $region58: #{tpu_custom_call.1} parent=35 // pred_check_branch
          %670 = sbr.rel (%p668) target = $region60
        $region59: #{tpu_custom_call.1} parent=35 // pred_region
          %s671 = smul.u32 4, %s32
          %673 = vsyncadd %s647, 0
          %s674 = smul.addr %s671, 8
          %s675 = scalar_lea.hbm %s5, %s674
          %s676 = sshll.u32 %s650, 4
          %s677 = int_to_ptr.vmem [resolvable:$true] %s676
          %s678 = sshll.u32 %s675, 4
          %s679 = int_to_ptr.hbm [resolvable:$true] %s678
          %684 = dma.vmem_to_hbm [thread:$0]  %s677, 512, %s679, %s647, 128, 128, 8
        $region60: #{tpu_custom_call.1} parent=35 // pred_fallthru
          _
      $region36: #{tpu_custom_call.1} parent=5 // pred_fallthru
        _
      %p685 = scmp.le.s32.totalorder 2, %s27
      // Predicated region
      $region61: #{tpu_custom_call.1} parent=5 // pred_check
        %p686 = pneg %p685
      $region62: #{tpu_custom_call.1} parent=5 // pred_check_branch
        %688 = sbr.rel (%p686) target = $region64
      $region63: #{tpu_custom_call.1} parent=5 // pred_region
        %s689 = ssub.s32 %s27, 2
        // Predicated region
        $region65: #{tpu_custom_call.1} parent=63 // pred_check
          %p690 = pneg %p160
        $region66: #{tpu_custom_call.1} parent=63 // pred_check_branch
          %692 = sbr.rel (%p690) target = $region68
        $region67: #{tpu_custom_call.1} parent=63 // pred_region
          %s693 = sand.u32 %s145, 1
          %s694 = scalar_lea.sflag [#allocation4], %s693
          %s695 = sand.u32 %s145, 1
          %s696 = smul.addr %s695, 32
          %s697 = scalar_lea.vmem [#allocation10], %s696
          %699 = dma.done %s694, 512
        $region68: #{tpu_custom_call.1} parent=63 // pred_fallthru
          _
        // Predicated region
        $region69: #{tpu_custom_call.1} parent=63 // pred_check
          %p700 = pneg %p186
        $region70: #{tpu_custom_call.1} parent=63 // pred_check_branch
          %702 = sbr.rel (%p700) target = $region72
        $region71: #{tpu_custom_call.1} parent=63 // pred_region
          %s703 = sand.u32 %s171, 1
          %s704 = scalar_lea.sflag [#allocation12], %s703
          %s705 = sand.u32 %s171, 1
          %s706 = smul.addr %s705, 32
          %s707 = scalar_lea.vmem [#allocation11], %s706
          %709 = dma.done %s704, 512
        $region72: #{tpu_custom_call.1} parent=63 // pred_fallthru
          _
      $region64: #{tpu_custom_call.1} parent=5 // pred_fallthru
        _
    $region6: #{tpu_custom_call.1} parent=1 // loop_footer
      %s31 = sadd.s32 1, %s27
    $region7: #{tpu_custom_call.1} parent=1 // loop_footer_branch
      %26 = sbr.rel target = $region3
    $region8: #{tpu_custom_call.1} parent=1 // loop_exit
      _
    %710 = vsyncpa [#allocation3], 1
    %s711 = scalar_lea.sflag [#allocation3], 1
    %712 = vsyncpa %s711, 1
    %713 = vsyncpa [#allocation6], 1
    %s714 = scalar_lea.sflag [#allocation6], 1
    %715 = vsyncpa %s714, 1
    %716 = vsyncpa [#allocation9], 1
    %s717 = scalar_lea.sflag [#allocation9], 1
    %718 = vsyncpa %s717, 1
    %719 = vsyncpa [#allocation4], 1
    %s720 = scalar_lea.sflag [#allocation4], 1
    %721 = vsyncpa %s720, 1
    %722 = vsyncpa [#allocation12], 1
    %s723 = scalar_lea.sflag [#allocation12], 1
    %724 = vsyncpa %s723, 1

</llo_original>
